<compile_context>
chip_gen: v6e
topology: v6e:2x2x1
jax: 0.10.0
libtpu: 0.0.40
codegen_flags: <defaults>
</compile_context>

<pallas_src>
import functools
import math

import jax
import jax.numpy as jnp
from jax.experimental import pallas as pl
from jax.experimental.pallas import tpu as pltpu

_LANE = 128
_BLOCK_BYTES_BUDGET = 2 * 1024 * 1024  # ~2 MiB per pipelined buffer


def _batcher_pairs(n):
    """Compare-exchange pairs of Batcher's odd-even mergesort for n wires.

    Generated for the next power of two; comparators touching wires >= n are
    pruned.  This is valid because conceptual -inf sentinels sitting on the
    tail wires never move under a descending compare-exchange network, so all
    pruned comparators are no-ops.
    """
    if n <= 1:
        return ()
    m = 1
    while m < n:
        m *= 2

    def merge(lo, hi, r):
        step = r * 2
        if step < hi - lo:
            yield from merge(lo, hi, step)
            yield from merge(lo + r, hi, step)
            yield from ((i, i + r) for i in range(lo + r, hi - r, step))
        else:
            yield (lo, lo + r)

    def sort_range(lo, hi):
        if hi - lo >= 1:
            mid = lo + (hi - lo) // 2
            yield from sort_range(lo, mid)
            yield from sort_range(mid + 1, hi)
            yield from merge(lo, hi, 1)

    return tuple((i, j) for (i, j) in sort_range(0, m - 1) if j < n)


def _group_sort_kernel(x_ref, o_ref, *, num_groups, group_size, pairs):
    # Block (C, S, 128): channel on the leading (vreg-granular) axis, a dense
    # (S, 128) sublane x lane slab per channel.
    for g in range(num_groups):
        base = g * group_size
        rows = [x_ref[base + j] for j in range(group_size)]  # each (S, 128)
        for (i, j) in pairs:  # descending compare-exchange, fully unrolled
            a, b = rows[i], rows[j]
            rows[i] = jnp.maximum(a, b)
            rows[j] = jnp.minimum(a, b)
        for j in range(group_size):
            o_ref[base + j] = rows[j]  # direct lane-dense slab store


@functools.partial(jax.jit, static_argnums=(1,))
def group_sort(x, num_groups):
    """GroupSort forward.  x: (N, C) or (N, C, *spatial) (e.g. NCHW)."""
    orig_shape = x.shape
    orig_ndim = x.ndim
    C = x.shape[1]
    group_size = C // num_groups
    assert num_groups * group_size == C, "num_groups must divide channels"
    if group_size == 1:
        return x  # sorting size-1 groups is the identity

    if orig_ndim == 2:
        # (N, C): put the batch on the lane axis so stores stay lane-dense.
        data = x.T[None]  # (1, C, N)
    else:
        spatial = math.prod(x.shape[2:])
        data = x.reshape(x.shape[0], C, spatial)

    B, _, L = data.shape
    itemsize = jnp.dtype(x.dtype).itemsize

    # ---- tile selection: dense (S, 128) slabs per channel, VMEM-budgeted ----
    R = -(-L // _LANE)  # rows of 128 lanes after folding the last axis
    s_cap = max(8, (_BLOCK_BYTES_BUDGET // (C * _LANE * itemsize)) // 8 * 8)
    if R <= s_cap:
        S = R            # full extent in one block (no multiple-of-8 needed)
        R_pad = R
    else:
        best = None
        for cand in range(8, s_cap + 1, 8):
            r_pad = -(-R // cand) * cand
            key = (r_pad, -cand)      # least padding, then biggest tile
            if best is None or key < best[0]:
                best = (key, cand)
        S = best[1]
        R_pad = -(-R // S) * S

    L_pad = R_pad * _LANE
    padded = L_pad != L
    if padded:
        data = jnp.pad(data, ((0, 0), (0, 0), (0, L_pad - L)))
    x4 = data.reshape(B, C, R_pad, _LANE)

    grid = (B, R_pad // S)
    kernel = functools.partial(
        _group_sort_kernel,
        num_groups=num_groups,
        group_size=group_size,
        pairs=_batcher_pairs(group_size),
    )

    # Alias input->output only when the operand is a fresh buffer (pad or
    # transpose); aliasing a live caller buffer would force XLA to copy it.
    aliases = {0: 0} if (padded or orig_ndim == 2) else {}

    out4 = pl.pallas_call(
        kernel,
        out_shape=jax.ShapeDtypeStruct((B, C, R_pad, _LANE), x.dtype),
        grid=grid,
        in_specs=[pl.BlockSpec((None, C, S, _LANE), lambda b, s: (b, 0, s, 0))],
        out_specs=pl.BlockSpec((None, C, S, _LANE), lambda b, s: (b, 0, s, 0)),
        input_output_aliases=aliases,
        compiler_params=pltpu.CompilerParams(
            dimension_semantics=("parallel", "parallel"),
            vmem_limit_bytes=32 * 1024 * 1024,
        ),
    )(x4)

    out = out4.reshape(B, C, L_pad)[:, :, :L]
    if orig_ndim == 2:
        return out[0].T
    return out.reshape(orig_shape)


if __name__ == "__main__":
    key = jax.random.PRNGKey(0)

    # Conv-style input, NCHW (group_size = 2 -> MaxMin).
    N, C, H, W = 2, 4, 16, 16
    num_groups = 2
    x = jax.random.normal(key, (N, C, H, W), dtype=jnp.float32)
    y = jax.block_until_ready(group_sort(x, num_groups))
    gs = C // num_groups
    ref = -jnp.sort(-x.reshape(N, num_groups, gs, H, W), axis=2)
    assert jnp.allclose(y, ref.reshape(N, C, H, W)), "mismatch (NCHW, gs=2)"

    # Dense / 2-D input (N, C): batch gets mapped onto the lane axis.
    x2 = jax.random.normal(jax.random.PRNGKey(1), (16, 8), dtype=jnp.float32)
    y2 = jax.block_until_ready(group_sort(x2, 4))
    ref2 = -jnp.sort(-x2.reshape(16, 4, 2), axis=2)
    assert jnp.allclose(y2, ref2.reshape(16, 8)), "mismatch (2D, gs=2)"

    # Larger group size exercises the Batcher network + lane padding path.
    x3 = jax.random.normal(jax.random.PRNGKey(2), (2, 8, 4, 4), dtype=jnp.float32)
    y3 = jax.block_until_ready(group_sort(x3, 2))
    ref3 = -jnp.sort(-x3.reshape(2, 2, 4, 4, 4), axis=2)
    assert jnp.allclose(y3, ref3.reshape(2, 8, 4, 4)), "mismatch (NCHW, gs=4)"

    print("KERNEL_OK")
</pallas_src>

<mosaic_0001>
module attributes {stable_mosaic.version = 11 : i64} {
  func.func @_group_sort_kernel(%arg0: i32, %arg1: i32, %arg2: memref<1x4x2x128xf32, #tpu.memory_space<vmem>>, %arg3: memref<1x4x2x128xf32, #tpu.memory_space<vmem>>) attributes {dimension_semantics = [#tpu.dimension_semantics<parallel>, #tpu.dimension_semantics<parallel>], iteration_bounds = array<i64: 2, 1>, scalar_prefetch = 0 : i64, scratch_operands = 0 : i64, tpu.core_type = #tpu.core_type<tc>, window_params = [{transform_indices = @transform_0, window_bounds = array<i64: 1, 4, 2, 128>}, {transform_indices = @transform_1, window_bounds = array<i64: 1, 4, 2, 128>}]} {
    %c0 = arith.constant 0 : index
    %c0_0 = arith.constant 0 : index
    %c0_1 = arith.constant 0 : index
    %c0_2 = arith.constant 0 : index
    %0 = vector.load %arg2[%c0, %c0_0, %c0_1, %c0_2] : memref<1x4x2x128xf32, #tpu.memory_space<vmem>>, vector<1x1x2x128xf32>
    %1 = vector.shape_cast %0 : vector<1x1x2x128xf32> to vector<2x128xf32>
    %c0_3 = arith.constant 0 : index
    %c1 = arith.constant 1 : index
    %c0_4 = arith.constant 0 : index
    %c0_5 = arith.constant 0 : index
    %2 = vector.load %arg2[%c0_3, %c1, %c0_4, %c0_5] : memref<1x4x2x128xf32, #tpu.memory_space<vmem>>, vector<1x1x2x128xf32>
    %3 = vector.shape_cast %2 : vector<1x1x2x128xf32> to vector<2x128xf32>
    %4 = arith.maximumf %1, %3 : vector<2x128xf32>
    %5 = arith.minimumf %1, %3 : vector<2x128xf32>
    %c0_6 = arith.constant 0 : index
    %c0_7 = arith.constant 0 : index
    %c0_8 = arith.constant 0 : index
    %c0_9 = arith.constant 0 : index
    %6 = vector.load %arg3[%c0_6, %c0_7, %c0_8, %c0_9] : memref<1x4x2x128xf32, #tpu.memory_space<vmem>>, vector<1x1x2x128xf32>
    %7 = vector.shape_cast %6 : vector<1x1x2x128xf32> to vector<2x128xf32>
    %8 = vector.shape_cast %4 : vector<2x128xf32> to vector<1x1x2x128xf32>
    tpu.vector_store %arg3[%c0_6, %c0_7, %c0_8, %c0_9], %8 {strides = array<i32>} : memref<1x4x2x128xf32, #tpu.memory_space<vmem>>, vector<1x1x2x128xf32>,
    %c0_10 = arith.constant 0 : index
    %c1_11 = arith.constant 1 : index
    %c0_12 = arith.constant 0 : index
    %c0_13 = arith.constant 0 : index
    %9 = vector.load %arg3[%c0_10, %c1_11, %c0_12, %c0_13] : memref<1x4x2x128xf32, #tpu.memory_space<vmem>>, vector<1x1x2x128xf32>
    %10 = vector.shape_cast %9 : vector<1x1x2x128xf32> to vector<2x128xf32>
    %11 = vector.shape_cast %5 : vector<2x128xf32> to vector<1x1x2x128xf32>
    tpu.vector_store %arg3[%c0_10, %c1_11, %c0_12, %c0_13], %11 {strides = array<i32>} : memref<1x4x2x128xf32, #tpu.memory_space<vmem>>, vector<1x1x2x128xf32>,
    %c0_14 = arith.constant 0 : index
    %c2 = arith.constant 2 : index
    %c0_15 = arith.constant 0 : index
    %c0_16 = arith.constant 0 : index
    %12 = vector.load %arg2[%c0_14, %c2, %c0_15, %c0_16] : memref<1x4x2x128xf32, #tpu.memory_space<vmem>>, vector<1x1x2x128xf32>
    %13 = vector.shape_cast %12 : vector<1x1x2x128xf32> to vector<2x128xf32>
    %c0_17 = arith.constant 0 : index
    %c3 = arith.constant 3 : index
    %c0_18 = arith.constant 0 : index
    %c0_19 = arith.constant 0 : index
    %14 = vector.load %arg2[%c0_17, %c3, %c0_18, %c0_19] : memref<1x4x2x128xf32, #tpu.memory_space<vmem>>, vector<1x1x2x128xf32>
    %15 = vector.shape_cast %14 : vector<1x1x2x128xf32> to vector<2x128xf32>
    %16 = arith.maximumf %13, %15 : vector<2x128xf32>
    %17 = arith.minimumf %13, %15 : vector<2x128xf32>
    %c0_20 = arith.constant 0 : index
    %c2_21 = arith.constant 2 : index
    %c0_22 = arith.constant 0 : index
    %c0_23 = arith.constant 0 : index
    %18 = vector.load %arg3[%c0_20, %c2_21, %c0_22, %c0_23] : memref<1x4x2x128xf32, #tpu.memory_space<vmem>>, vector<1x1x2x128xf32>
    %19 = vector.shape_cast %18 : vector<1x1x2x128xf32> to vector<2x128xf32>
    %20 = vector.shape_cast %16 : vector<2x128xf32> to vector<1x1x2x128xf32>
    tpu.vector_store %arg3[%c0_20, %c2_21, %c0_22, %c0_23], %20 {strides = array<i32>} : memref<1x4x2x128xf32, #tpu.memory_space<vmem>>, vector<1x1x2x128xf32>,
    %c0_24 = arith.constant 0 : index
    %c3_25 = arith.constant 3 : index
    %c0_26 = arith.constant 0 : index
    %c0_27 = arith.constant 0 : index
    %21 = vector.load %arg3[%c0_24, %c3_25, %c0_26, %c0_27] : memref<1x4x2x128xf32, #tpu.memory_space<vmem>>, vector<1x1x2x128xf32>
    %22 = vector.shape_cast %21 : vector<1x1x2x128xf32> to vector<2x128xf32>
    %23 = vector.shape_cast %17 : vector<2x128xf32> to vector<1x1x2x128xf32>
    tpu.vector_store %arg3[%c0_24, %c3_25, %c0_26, %c0_27], %23 {strides = array<i32>} : memref<1x4x2x128xf32, #tpu.memory_space<vmem>>, vector<1x1x2x128xf32>,
    return
  }
  func.func @transform_0(%arg0: i32, %arg1: i32) -> (i32, i32, i32, i32) {
    %c0_i32 = arith.constant 0 : i32
    %c0_i32_0 = arith.constant 0 : i32
    %c0_i32_1 = arith.constant 0 : i32
    return %arg0, %c0_i32, %arg1, %c0_i32_0 : i32, i32, i32, i32
  }
  func.func @transform_1(%arg0: i32, %arg1: i32) -> (i32, i32, i32, i32) {
    %c0_i32 = arith.constant 0 : i32
    %c0_i32_0 = arith.constant 0 : i32
    %c0_i32_1 = arith.constant 0 : i32
    return %arg0, %c0_i32, %arg1, %c0_i32_0 : i32, i32, i32, i32
  }
}

</mosaic_0001>

<llo_original>
// kernel: group_sort.1
$region0: #{group_sort.1}
  #allocation0 [shape = 'u32[]', space=smem, size = 0x4, offset = 0x4, fixed_abs, tag = 'smem constant byte address 0x4 - core index']
  #allocation1 [shape = 'u32[144,128]{1,0:T(1,128)}', space=vmem, size = 0x12000, scoped, tag = 'internal scratch']
  %s0 = inlined_call_operand.vmem [shape: f32[2,4,2,128], index: 0, kind: input, shape index: {}]
  %s1 = inlined_call_operand.vmem [shape: f32[2,4,2,128], index: 1, kind: output, shape index: {}]
  %s2 = sld [smem:[#allocation0]]
  $region37: #{group_sort.1} parent=0
    _
  %s4 = ssub.s32 1, %s2
  %s5 = scalar_select 0, %s4, %s2
  loop: start=0, step=1, limit=4
  $region2: #{group_sort.1} parent=0 // loop_pre_header
    _
  $region3: #{group_sort.1} parent=0 // loop_header
    %s7 = sphi 0, %s11
    %p8 = scmp.ge.s32.totalorder %s7, 4
    %s14 = sphi 0, %s26
    %s15 = sphi 0, %s22
    %s16 = sphi 0, %s14
    %s17 = sphi 0, %s15
    %s18 = sphi 0, %s16
    %s19 = sphi 0, %s17
    %s31 = sphi 0, %s33
    %s34 = sphi 0, %s31
    %s35 = sphi 0, %s34
    %s51 = sphi 0, %s35
    %s59 = sphi 0, %s61
    %s62 = sphi 0, %s59
    %s63 = sphi 0, %s62
    %s79 = sphi 0, %s63
  $region4: #{group_sort.1} parent=0 // loop_header_branch
    %10 = sbr.rel (%p8) target = $region8
  $region5: #{group_sort.1} parent=0 // loop_body
    %s12 = ssub.s32 %s7, 1
    %s13 = ssub.s32 %s7, 2
    %s20 = sadd.s32 1, %s15
    %p21 = scmp.ge.s32.totalorder %s20, 1
    %s22 = scalar_select %p21, 0, %s20
    %s23 = sadd.s32 1, %s14
    %s24 = scalar_select %p21, %s23, %s14
    %p25 = scmp.ge.s32.totalorder %s24, 2
    %s26 = scalar_select %p25, 0, %s24
    %s27 = ssub.s32 %s14, %s26
    %s28 = ssub.s32 %s15, %s22
    %s29 = sor.u32 %s27, %s28
    %p30 = scmp.eq.s32.totalorder %s29, 0
    %s32 = sadd.s32 %s31, 1
    %s33 = scalar_select %p30, %s31, %s32
    %p36 = pneg %p30
    %p37 = scmp.eq.s32.totalorder %s7, 1
    %p38 = por %p36, %p37
    %p39 = scmp.ne.s32.totalorder %s31, %s34
    %p40 = scmp.eq.s32.totalorder %s7, 0
    %p41 = por %p39, %p40
    %p42 = scmp.ne.s32.totalorder %s31, %s34
    %p43 = scmp.eq.s32.totalorder %s12, 1
    %p44 = por %p42, %p43
    %p45 = scmp.ne.s32.totalorder %s34, %s35
    %p46 = scmp.eq.s32.totalorder %s12, 0
    %p47 = por %p45, %p46
    %p48 = scmp.ne.s32.totalorder %s34, %s35
    %p49 = scmp.eq.s32.totalorder %s13, 1
    %p50 = por %p48, %p49
    %p52 = scmp.ne.s32.totalorder %s35, %s51
    %p53 = scmp.eq.s32.totalorder %s13, 0
    %p54 = por %p52, %p53
    %s55 = ssub.s32 %s14, %s26
    %s56 = ssub.s32 %s15, %s22
    %s57 = sor.u32 %s55, %s56
    %p58 = scmp.eq.s32.totalorder %s57, 0
    %s60 = sadd.s32 %s59, 1
    %s61 = scalar_select %p58, %s59, %s60
    %p64 = pneg %p58
    %p65 = scmp.eq.s32.totalorder %s7, 1
    %p66 = por %p64, %p65
    %p67 = scmp.ne.s32.totalorder %s59, %s62
    %p68 = scmp.eq.s32.totalorder %s7, 0
    %p69 = por %p67, %p68
    %p70 = scmp.ne.s32.totalorder %s59, %s62
    %p71 = scmp.eq.s32.totalorder %s12, 1
    %p72 = por %p70, %p71
    %p73 = scmp.ne.s32.totalorder %s62, %s63
    %p74 = scmp.eq.s32.totalorder %s12, 0
    %p75 = por %p73, %p74
    %p76 = scmp.ne.s32.totalorder %s62, %s63
    %p77 = scmp.eq.s32.totalorder %s13, 1
    %p78 = por %p76, %p77
    %p80 = scmp.ne.s32.totalorder %s63, %s79
    %p81 = scmp.eq.s32.totalorder %s13, 0
    %p82 = por %p80, %p81
    %p83 = scmp.le.s32.totalorder 1, %s7
    %p84 = scmp.lt.s32.totalorder %s7, 3
    %p85 = pnand %p83, %p84
    %p86 = pneg %p85
    // Predicated region
    $region9: #{group_sort.1} parent=5 // pred_check
      _
    $region10: #{group_sort.1} parent=5 // pred_check_branch
      %88 = sbr.rel (%p85) target = $region12
    $region11: #{group_sort.1} parent=5 // pred_region
      %s89 = ssub.s32 %s7, 1
    $region12: #{group_sort.1} parent=5 // pred_fallthru
      _
    %p90 = scmp.lt.s32.totalorder %s7, 2
    // Predicated region
    $region13: #{group_sort.1} parent=5 // pred_check
      %p91 = pneg %p90
    $region14: #{group_sort.1} parent=5 // pred_check_branch
      %93 = sbr.rel (%p91) target = $region16
    $region15: #{group_sort.1} parent=5 // pred_region
      // Predicated region
      $region17: #{group_sort.1} parent=15 // pred_check
        %p94 = pneg %p41
      $region18: #{group_sort.1} parent=15 // pred_check_branch
        %96 = sbr.rel (%p94) target = $region20
      $region19: #{group_sort.1} parent=15 // pred_region
        %p97 = scmp.lt.s32.totalorder %s14, 1
        %s98 = scalar_select %p97, %s14, 1
        %p99 = scmp.lt.s32.totalorder %s15, 0
        %s100 = scalar_select %p99, %s15, 0
        %s101 = smul.addr %s98, 4
        %s102 = sadd.s32 %s100, %s101
        %s103 = smul.addr %s102, 2
        %s104 = scalar_lea.vmem %s0, %s103
      $region20: #{group_sort.1} parent=15 // pred_fallthru
        _
    $region16: #{group_sort.1} parent=5 // pred_fallthru
      _
    %p105 = scmp.le.s32.totalorder 1, %s7
    %p106 = scmp.lt.s32.totalorder %s7, 3
    %p107 = pnand %p105, %p106
    %p108 = pneg %p107
    // Predicated region
    $region21: #{group_sort.1} parent=5 // pred_check
      _
    $region22: #{group_sort.1} parent=5 // pred_check_branch
      %110 = sbr.rel (%p107) target = $region24
    $region23: #{group_sort.1} parent=5 // pred_region
      %s111 = ssub.s32 %s7, 1
      %p112 = scmp.lt.s32.totalorder %s16, 1
      %s113 = scalar_select %p112, %s16, 1
      %p114 = scmp.lt.s32.totalorder %s17, 0
      %s115 = scalar_select %p114, %s17, 0
      %s116 = smul.addr %s113, 4
      %s117 = sadd.s32 %s115, %s116
      %s118 = smul.addr %s117, 2
      %s119 = scalar_lea.vmem %s0, %s118
      %p120 = pneg %p47
      %p121 = pneg %p44
      %p122 = pneg %p75
      %p123 = pneg %p72
      %p124 = scmp.lt.s32.totalorder %s16, 1
      %s125 = scalar_select %p124, %s16, 1
      %p126 = scmp.lt.s32.totalorder %s17, 0
      %s127 = scalar_select %p126, %s17, 0
      %s128 = smul.addr %s125, 4
      %s129 = sadd.s32 %s127, %s128
      %s130 = smul.addr %s129, 2
      %s131 = scalar_lea.vmem %s1, %s130
      %p132 = scmp.lt.s32.totalorder %s16, 1
      %s133 = scalar_select %p132, %s16, 1
      %p134 = scmp.lt.s32.totalorder %s17, 0
      %s135 = scalar_select %p134, %s17, 0
      %s136 = smul.addr %s133, 4
      %s137 = sadd.s32 %s135, %s136
      %s138 = smul.addr %s137, 2
      %s139 = scalar_lea.vmem %s0, %s138
      %p140 = scmp.lt.s32.totalorder %s16, 1
      %s141 = scalar_select %p140, %s16, 1
      %p142 = scmp.lt.s32.totalorder %s17, 0
      %s143 = scalar_select %p142, %s17, 0
      %s144 = smul.addr %s141, 4
      %s145 = sadd.s32 %s143, %s144
      %s146 = smul.addr %s145, 2
      %s147 = scalar_lea.vmem %s1, %s146
      %v148 = vld [vmem:[%s139] sm:$0x3]
      %s149 = scalar_lea.vmem %s139, 2
      %v150 = vld [vmem:[%s149] sm:$0x3]
      %v151 = vmax.f32 %v148, %v150
      %v152 = vmin.f32 %v148, %v150
      %153 = vst [vmem:[%s147] sm:$0x3] %v151
      %s154 = scalar_lea.vmem %s147, 2
      %155 = vst [vmem:[%s154] sm:$0x3] %v152
      %s156 = scalar_lea.vmem %s139, 4
      %v157 = vld [vmem:[%s156] sm:$0x3]
      %s158 = scalar_lea.vmem %s139, 6
      %v159 = vld [vmem:[%s158] sm:$0x3]
      %v160 = vmax.f32 %v157, %v159
      %v161 = vmin.f32 %v157, %v159
      %s162 = scalar_lea.vmem %s147, 4
      %163 = vst [vmem:[%s162] sm:$0x3] %v160
      %s164 = scalar_lea.vmem %s147, 6
      %165 = vst [vmem:[%s164] sm:$0x3] %v161
      %p166 = scmp.lt.s32.totalorder %s16, 1
      %s167 = scalar_select %p166, %s16, 1
      %p168 = scmp.lt.s32.totalorder %s17, 0
      %s169 = scalar_select %p168, %s17, 0
      %s170 = smul.addr %s167, 4
      %s171 = sadd.s32 %s169, %s170
      %s172 = smul.addr %s171, 2
      %s173 = scalar_lea.vmem %s1, %s172
      // Predicated region
      $region25: #{group_sort.1} parent=23 // pred_check
        %p174 = pneg %p72
      $region26: #{group_sort.1} parent=23 // pred_check_branch
        %176 = sbr.rel (%p174) target = $region28
      $region27: #{group_sort.1} parent=23 // pred_region
        _
      $region28: #{group_sort.1} parent=23 // pred_fallthru
        _
    $region24: #{group_sort.1} parent=5 // pred_fallthru
      _
    %p177 = scmp.le.s32.totalorder 2, %s7
    // Predicated region
    $region29: #{group_sort.1} parent=5 // pred_check
      %p178 = pneg %p177
    $region30: #{group_sort.1} parent=5 // pred_check_branch
      %180 = sbr.rel (%p178) target = $region32
    $region31: #{group_sort.1} parent=5 // pred_region
      %s181 = ssub.s32 %s7, 2
      // Predicated region
      $region33: #{group_sort.1} parent=31 // pred_check
        %p182 = pneg %p78
      $region34: #{group_sort.1} parent=31 // pred_check_branch
        %184 = sbr.rel (%p182) target = $region36
      $region35: #{group_sort.1} parent=31 // pred_region
        %p185 = scmp.lt.s32.totalorder %s18, 1
        %s186 = scalar_select %p185, %s18, 1
        %p187 = scmp.lt.s32.totalorder %s19, 0
        %s188 = scalar_select %p187, %s19, 0
        %s189 = smul.addr %s186, 4
        %s190 = sadd.s32 %s188, %s189
        %s191 = smul.addr %s190, 2
        %s192 = scalar_lea.vmem %s1, %s191
      $region36: #{group_sort.1} parent=31 // pred_fallthru
        _
    $region32: #{group_sort.1} parent=5 // pred_fallthru
      _
  $region6: #{group_sort.1} parent=0 // loop_footer
    %s11 = sadd.s32 1, %s7
  $region7: #{group_sort.1} parent=0 // loop_footer_branch
    %6 = sbr.rel target = $region3
  $region8: #{group_sort.1} parent=0 // loop_exit
    _

</llo_original>
